<compile_context>
chip_gen: v5e
topology: v5e:2x2
jax: 0.10.0
libtpu: 0.0.40
codegen_flags: <defaults>
</compile_context>

<pallas_src>
import math

import jax
import jax.numpy as jnp
from jax import lax
from jax.experimental import pallas as pl
from jax.experimental.pallas import tpu as pltpu

N_HIDDEN = 5          # n_hidden in the PyTorch module
GL = 16               # lanes per (gate, direction) block (H = 5 <= 16)
DBLK = 2 * GL         # lanes per gate pair [fwd | bwd] = 32
GW = 4 * DBLK         # packed gate width = 128 (one vreg of lanes)
SUBLANE = 8           # f32 sublane tile


def bilstm_attention_kernel(
    xcat_ref,    # [T*Bp, 2E]  [x_fwd(t) | x_rev(t)] time-major, batch-padded
    wih_ref,     # [2E, GW]    [packed W_ih_f^T ; packed W_ih_b^T]
    whh_ref,     # [GW, GW]    rows 0:H fwd W_hh^T, rows GL:GL+H bwd W_hh^T, rest 0
    bias_ref,    # [1, GW]     packed (b_ih + b_hh), both directions, pads 0
    h0_ref,      # [Bp, GW]    initial hidden: fwd at lanes 0:H, bwd at GL:GL+H
    c0_ref,      # [Bp, GW]    initial cell, same layout
    woutf_ref,   # [GW, GW]    out-linear: rows 0:H -> cols 0:C, rest 0
    woutb_ref,   # [GW, GW]    out-linear: rows GL:GL+H -> cols 0:C, rest 0
    bout_ref,    # [1, GW]     out-linear bias at cols 0:C, rest 0
    logits_ref,  # out [Bp, GW] float32 (real classes in [:, :C])
):
    Bp = h0_ref.shape[0]
    T = xcat_ref.shape[0] // Bp

    # ---- hoisted input projection: ONE matmul for both directions, bias folded.
    xw = (jnp.dot(xcat_ref[...], wih_ref[...],
                  preferred_element_type=jnp.float32)
          + bias_ref[...])                                       # [T*Bp, GW]

    whh = whh_ref[...]
    h0 = h0_ref[...]
    lane = lax.broadcasted_iota(jnp.int32, (Bp, GW), 1)

    # ---- fused, fully-unrolled bidirectional recurrence.
    # Packed lane layout (one vreg): [ i | f | o | g ], each DBLK = 32 lanes
    # ([fwd GL | bwd GL]).  sigmoid on i/f/o lanes, tanh on g, gates aligned
    # to lanes 0:DBLK via XLU rolls; h/c stay in the padded [Bp, GW] layout.
    h = h0                                                       # [Bp, GW]
    c = c0_ref[...]
    hs = []   # hs[s]: fwd h(time=s) at lanes 0:GL, bwd h(time=T-1-s) at GL:2*GL
    for s in range(T):
        gates = xw[s * Bp:(s + 1) * Bp, :] + jnp.dot(
            h, whh, preferred_element_type=jnp.float32)          # [Bp, GW]
        act = jnp.where(lane < 3 * DBLK,
                        jax.nn.sigmoid(gates), jnp.tanh(gates))  # one vreg EUP each
        i_al = act                                               # i at lanes 0:DBLK
        f_al = pltpu.roll(act, shift=GW - DBLK, axis=1)          # f -> lanes 0:DBLK
        o_al = pltpu.roll(act, shift=GW - 2 * DBLK, axis=1)      # o -> lanes 0:DBLK
        g_al = pltpu.roll(act, shift=GW - 3 * DBLK, axis=1)      # g -> lanes 0:DBLK
        c = f_al * c + i_al * g_al
        h = o_al * jnp.tanh(c)
        hs.append(h)

    # ---- attention (query = the *initial* hidden state, as in the module).
    qf = jnp.where(lane < GL, h0, 0.0)    # forward query lanes only
    qb = jnp.where(lane >= GL, h0, 0.0)   # backward query lanes (h0 is 0 past 2*GL)
    # output time t: forward state is hs[t], backward state is hs[T-1-t]
    scores = [jnp.sum(hs[t] * qf + hs[T - 1 - t] * qb, axis=1, keepdims=True)
              for t in range(T)]          # T x [Bp, 1]
    m = scores[0]
    for t in range(1, T):
        m = jnp.maximum(m, scores[t])
    es = [jnp.exp(s - m) for s in scores]
    denom = es[0]
    for t in range(1, T):
        denom = denom + es[t]
    inv = 1.0 / denom                     # exact divide (epilogue, off hot chain)

    ctx_f = jnp.zeros((Bp, GW), jnp.float32)
    ctx_b = jnp.zeros((Bp, GW), jnp.float32)
    for t in range(T):
        w_t = es[t] * inv                 # [Bp, 1] softmax weight at time t
        ctx_f = ctx_f + w_t * hs[t]
        ctx_b = ctx_b + w_t * hs[T - 1 - t]

    # ---- output linear (argmax is computed in the wrapper).
    logits_ref[...] = (
        jnp.dot(ctx_f, woutf_ref[...], preferred_element_type=jnp.float32)
        + jnp.dot(ctx_b, woutb_ref[...], preferred_element_type=jnp.float32)
        + bout_ref[...])


def _pack_gate_cols(w, direction):
    """w: [rows, 4H] with PyTorch gate column order (i, f, g, o).

    Returns [rows, GW]: each gate's H real columns land in its GL-lane slot,
    packed pair order (i, f, o, g); forward direction at lane offset 0 of the
    pair, backward at offset GL.  All pad columns are exactly zero (required
    so pad gate lanes stay 0 through the recurrence)."""
    H = N_HIDDEN
    rows = w.shape[0]
    out = jnp.zeros((rows, GW), jnp.float32)
    torch_gate = (0, 1, 3, 2)   # packed slot (i, f, o, g) <- torch (i, f, g, o)
    for slot, tg in enumerate(torch_gate):
        col0 = slot * DBLK + direction * GL
        out = out.at[:, col0:col0 + H].set(w[:, tg * H:(tg + 1) * H])
    return out


def bilstm_attention_forward(X, params, h0, c0):
    """X: [B, T, E] float32.  h0, c0: [2, B, H] (dir 0 = forward, 1 = reverse)."""
    B, T, E = X.shape
    H = N_HIDDEN
    C = params["w_out"].shape[0]
    Bp = ((B + SUBLANE - 1) // SUBLANE) * SUBLANE   # pad batch to sublane tile

    x_tm = jnp.transpose(X, (1, 0, 2)).astype(jnp.float32)        # [T, B, E]
    x_tm = jnp.pad(x_tm, ((0, 0), (0, Bp - B), (0, 0)))           # [T, Bp, E]
    xf = x_tm.reshape(T * Bp, E)
    xr = x_tm[::-1].reshape(T * Bp, E)                            # time-reversed
    xcat = jnp.concatenate([xf, xr], axis=1)                      # [T*Bp, 2E]

    wih = jnp.concatenate(
        [_pack_gate_cols(params["w_ih_f"].T, 0),
         _pack_gate_cols(params["w_ih_b"].T, 1)], axis=0)         # [2E, GW]
    whh = jnp.zeros((GW, GW), jnp.float32)
    whh = whh.at[:H, :].set(_pack_gate_cols(params["w_hh_f"].T, 0))
    whh = whh.at[GL:GL + H, :].set(_pack_gate_cols(params["w_hh_b"].T, 1))
    bias = (_pack_gate_cols((params["b_ih_f"] + params["b_hh_f"]).reshape(1, 4 * H), 0)
            + _pack_gate_cols((params["b_ih_b"] + params["b_hh_b"]).reshape(1, 4 * H), 1))

    def pad_state(s):  # [2, B, H] -> [Bp, GW]  (fwd lanes 0:H, bwd lanes GL:GL+H)
        out = jnp.zeros((Bp, GW), jnp.float32)
        out = out.at[:B, :H].set(s[0])
        out = out.at[:B, GL:GL + H].set(s[1])
        return out

    h0p = pad_state(h0)
    c0p = pad_state(c0)

    woutf = jnp.zeros((GW, GW), jnp.float32).at[:H, :C].set(params["w_out"][:, :H].T)
    woutb = jnp.zeros((GW, GW), jnp.float32).at[GL:GL + H, :C].set(params["w_out"][:, H:].T)
    bout = jnp.zeros((1, GW), jnp.float32).at[0, :C].set(params["b_out"])

    args = (xcat, wih, whh, bias, h0p, c0p, woutf, woutb, bout)
    vmem = pl.BlockSpec(memory_space=pltpu.MemorySpace.VMEM)
    logits_pad = pl.pallas_call(
        bilstm_attention_kernel,
        out_shape=jax.ShapeDtypeStruct((Bp, GW), jnp.float32),
        in_specs=[vmem] * len(args),
        out_specs=vmem,
    )(*args)
    logits = logits_pad[:B, :C]
    preds = jnp.argmax(logits, axis=1)    # argmax moved out of the kernel
    return logits, preds


def reference_forward(X, params, h0, c0):
    """Pure-JAX reference mirroring the PyTorch forward (sanity check)."""
    B, T, E = X.shape
    H = N_HIDDEN
    x_tm = jnp.transpose(X, (1, 0, 2))

    def run_dir(wih, whh, bih, bhh, h, c, reverse):
        outs = [None] * T
        times = range(T - 1, -1, -1) if reverse else range(T)
        for t in times:
            gates = x_tm[t] @ wih.T + bih + h @ whh.T + bhh
            i = jax.nn.sigmoid(gates[:, :H])
            f = jax.nn.sigmoid(gates[:, H:2 * H])
            g = jnp.tanh(gates[:, 2 * H:3 * H])
            o = jax.nn.sigmoid(gates[:, 3 * H:])
            c = f * c + i * g
            h = o * jnp.tanh(c)
            outs[t] = h
        return jnp.stack(outs, axis=0)                            # [T, B, H]

    of = run_dir(params["w_ih_f"], params["w_hh_f"], params["b_ih_f"],
                 params["b_hh_f"], h0[0], c0[0], reverse=False)
    ob = run_dir(params["w_ih_b"], params["w_hh_b"], params["b_ih_b"],
                 params["b_hh_b"], h0[1], c0[1], reverse=True)
    output = jnp.transpose(jnp.concatenate([of, ob], axis=-1), (1, 0, 2))  # [B,T,2H]

    hidden = jnp.concatenate([h0[0], h0[1]], axis=1)              # [B, 2H]
    attn = jnp.einsum("btk,bk->bt", output, hidden)
    soft = jax.nn.softmax(attn, axis=1)
    context = jnp.einsum("btk,bt->bk", output, soft)              # [B, 2H]
    logits = context @ params["w_out"].T + params["b_out"]
    return logits, jnp.argmax(logits, axis=1)


if __name__ == "__main__":
    B, T, E, C = 2, 8, 16, 4
    H = N_HIDDEN

    key = jax.random.PRNGKey(0)
    k = jax.random.split(key, 14)
    lstm_bound = 1.0 / math.sqrt(H)
    lin_bound = 1.0 / math.sqrt(2 * H)

    def u(kk, shape, bound):
        return jax.random.uniform(kk, shape, jnp.float32, -bound, bound)

    params = {
        "w_ih_f": u(k[0], (4 * H, E), lstm_bound),
        "w_hh_f": u(k[1], (4 * H, H), lstm_bound),
        "b_ih_f": u(k[2], (4 * H,), lstm_bound),
        "b_hh_f": u(k[3], (4 * H,), lstm_bound),
        "w_ih_b": u(k[4], (4 * H, E), lstm_bound),
        "w_hh_b": u(k[5], (4 * H, H), lstm_bound),
        "b_ih_b": u(k[6], (4 * H,), lstm_bound),
        "b_hh_b": u(k[7], (4 * H,), lstm_bound),
        "w_out":  u(k[8], (C, 2 * H), lin_bound),
        "b_out":  u(k[9], (C,), lin_bound),
    }

    X = jax.random.normal(k[10], (B, T, E), jnp.float32)
    # TODO(synk): the PyTorch module draws torch.randn initial states inside
    # forward(); deterministic jax.random stand-ins are used here instead.
    h0 = jax.random.normal(k[11], (2, B, H), jnp.float32)
    c0 = jax.random.normal(k[12], (2, B, H), jnp.float32)

    logits, preds = bilstm_attention_forward(X, params, h0, c0)
    jax.block_until_ready((logits, preds))

    ref_logits, ref_preds = reference_forward(X, params, h0, c0)
    assert logits.shape == (B, C) and preds.shape == (B,)
    assert jnp.allclose(logits, ref_logits, atol=1e-2, rtol=1e-2), "logits mismatch"
    assert jnp.array_equal(preds, ref_preds), "argmax mismatch"

    print("KERNEL_OK")
</pallas_src>

<mosaic_0001>
module attributes {stable_mosaic.version = 11 : i64} {
  func.func @bilstm_attention_kernel(%arg0: memref<64x32xf32, #tpu.memory_space<vmem>>, %arg1: memref<32x128xf32, #tpu.memory_space<vmem>>, %arg2: memref<128x128xf32, #tpu.memory_space<vmem>>, %arg3: memref<1x128xf32, #tpu.memory_space<vmem>>, %arg4: memref<8x128xf32, #tpu.memory_space<vmem>>, %arg5: memref<8x128xf32, #tpu.memory_space<vmem>>, %arg6: memref<128x128xf32, #tpu.memory_space<vmem>>, %arg7: memref<128x128xf32, #tpu.memory_space<vmem>>, %arg8: memref<1x128xf32, #tpu.memory_space<vmem>>, %arg9: memref<8x128xf32, #tpu.memory_space<vmem>>) attributes {dimension_semantics = [], scalar_prefetch = 0 : i64, scratch_operands = 0 : i64, tpu.core_type = #tpu.core_type<tc>} {
    %c0 = arith.constant 0 : index
    %c0_0 = arith.constant 0 : index
    %0 = vector.load %arg0[%c0, %c0_0] : memref<64x32xf32, #tpu.memory_space<vmem>>, vector<64x32xf32>
    %c0_1 = arith.constant 0 : index
    %c0_2 = arith.constant 0 : index
    %1 = vector.load %arg1[%c0_1, %c0_2] : memref<32x128xf32, #tpu.memory_space<vmem>>, vector<32x128xf32>
    %cst = arith.constant dense<0.000000e+00> : vector<64x128xf32>
    %2 = tpu.matmul %0, %1, %cst {dimension_numbers = #tpu.dot_dimension_numbers<[1], [0], [0], [1], [0, 0, 1, 1], [], []>} : vector<64x32xf32>, vector<32x128xf32>, vector<64x128xf32> -> vector<64x128xf32>
    %c0_3 = arith.constant 0 : index
    %c0_4 = arith.constant 0 : index
    %3 = vector.load %arg3[%c0_3, %c0_4] : memref<1x128xf32, #tpu.memory_space<vmem>>, vector<1x128xf32>
    %4 = vector.broadcast %3 : vector<1x128xf32> to vector<64x128xf32>
    %5 = arith.addf %2, %4 : vector<64x128xf32>
    %c0_5 = arith.constant 0 : index
    %c0_6 = arith.constant 0 : index
    %6 = vector.load %arg2[%c0_5, %c0_6] : memref<128x128xf32, #tpu.memory_space<vmem>>, vector<128x128xf32>
    %c0_7 = arith.constant 0 : index
    %c0_8 = arith.constant 0 : index
    %7 = vector.load %arg4[%c0_7, %c0_8] : memref<8x128xf32, #tpu.memory_space<vmem>>, vector<8x128xf32>
    %8 = tpu.iota {dimensions = array<i32: 1>} : vector<8x128xi32>
    %c0_9 = arith.constant 0 : index
    %c0_10 = arith.constant 0 : index
    %9 = vector.load %arg5[%c0_9, %c0_10] : memref<8x128xf32, #tpu.memory_space<vmem>>, vector<8x128xf32>
    %10 = vector.extract_strided_slice %5 {offsets = [0, 0], sizes = [8, 128], strides = [1, 1]} : vector<64x128xf32> to vector<8x128xf32>
    %cst_11 = arith.constant dense<0.000000e+00> : vector<8x128xf32>
    %11 = tpu.matmul %7, %6, %cst_11 {dimension_numbers = #tpu.dot_dimension_numbers<[1], [0], [0], [1], [0, 0, 1, 1], [], []>} : vector<8x128xf32>, vector<128x128xf32>, vector<8x128xf32> -> vector<8x128xf32>
    %12 = arith.addf %10, %11 : vector<8x128xf32>
    %c96_i32 = arith.constant 96 : i32
    %13 = vector.broadcast %c96_i32 : i32 to vector<8x128xi32>
    %14 = arith.cmpi slt, %8, %13 : vector<8x128xi32>
    %15 = arith.negf %12 : vector<8x128xf32>
    %16 = math.exp %15 : vector<8x128xf32>
    %cst_12 = arith.constant 1.000000e+00 : f32
    %17 = vector.broadcast %cst_12 : f32 to vector<8x128xf32>
    %18 = arith.addf %17, %16 : vector<8x128xf32>
    %19 = arith.divf %17, %18 : vector<8x128xf32>
    %20 = math.tanh %12 : vector<8x128xf32>
    %21 = arith.select %14, %19, %20 : vector<8x128xi1>, vector<8x128xf32>
    %c96_i32_13 = arith.constant 96 : i32
    %22 = tpu.dynamic_rotate %21 by %c96_i32_13 dim 1 : vector<8x128xf32>, i32 -> vector<8x128xf32>
    %c64_i32 = arith.constant 64 : i32
    %23 = tpu.dynamic_rotate %21 by %c64_i32 dim 1 : vector<8x128xf32>, i32 -> vector<8x128xf32>
    %c32_i32 = arith.constant 32 : i32
    %24 = tpu.dynamic_rotate %21 by %c32_i32 dim 1 : vector<8x128xf32>, i32 -> vector<8x128xf32>
    %25 = arith.mulf %22, %9 : vector<8x128xf32>
    %26 = arith.mulf %21, %24 : vector<8x128xf32>
    %27 = arith.addf %25, %26 : vector<8x128xf32>
    %28 = math.tanh %27 : vector<8x128xf32>
    %29 = arith.mulf %23, %28 : vector<8x128xf32>
    %30 = vector.extract_strided_slice %5 {offsets = [8, 0], sizes = [8, 128], strides = [1, 1]} : vector<64x128xf32> to vector<8x128xf32>
    %cst_14 = arith.constant dense<0.000000e+00> : vector<8x128xf32>
    %31 = tpu.matmul %29, %6, %cst_14 {dimension_numbers = #tpu.dot_dimension_numbers<[1], [0], [0], [1], [0, 0, 1, 1], [], []>} : vector<8x128xf32>, vector<128x128xf32>, vector<8x128xf32> -> vector<8x128xf32>
    %32 = arith.addf %30, %31 : vector<8x128xf32>
    %c96_i32_15 = arith.constant 96 : i32
    %33 = vector.broadcast %c96_i32_15 : i32 to vector<8x128xi32>
    %34 = arith.cmpi slt, %8, %33 : vector<8x128xi32>
    %35 = arith.negf %32 : vector<8x128xf32>
    %36 = math.exp %35 : vector<8x128xf32>
    %cst_16 = arith.constant 1.000000e+00 : f32
    %37 = vector.broadcast %cst_16 : f32 to vector<8x128xf32>
    %38 = arith.addf %37, %36 : vector<8x128xf32>
    %39 = arith.divf %37, %38 : vector<8x128xf32>
    %40 = math.tanh %32 : vector<8x128xf32>
    %41 = arith.select %34, %39, %40 : vector<8x128xi1>, vector<8x128xf32>
    %c96_i32_17 = arith.constant 96 : i32
    %42 = tpu.dynamic_rotate %41 by %c96_i32_17 dim 1 : vector<8x128xf32>, i32 -> vector<8x128xf32>
    %c64_i32_18 = arith.constant 64 : i32
    %43 = tpu.dynamic_rotate %41 by %c64_i32_18 dim 1 : vector<8x128xf32>, i32 -> vector<8x128xf32>
    %c32_i32_19 = arith.constant 32 : i32
    %44 = tpu.dynamic_rotate %41 by %c32_i32_19 dim 1 : vector<8x128xf32>, i32 -> vector<8x128xf32>
    %45 = arith.mulf %42, %27 : vector<8x128xf32>
    %46 = arith.mulf %41, %44 : vector<8x128xf32>
    %47 = arith.addf %45, %46 : vector<8x128xf32>
    %48 = math.tanh %47 : vector<8x128xf32>
    %49 = arith.mulf %43, %48 : vector<8x128xf32>
    %50 = vector.extract_strided_slice %5 {offsets = [16, 0], sizes = [8, 128], strides = [1, 1]} : vector<64x128xf32> to vector<8x128xf32>
    %cst_20 = arith.constant dense<0.000000e+00> : vector<8x128xf32>
    %51 = tpu.matmul %49, %6, %cst_20 {dimension_numbers = #tpu.dot_dimension_numbers<[1], [0], [0], [1], [0, 0, 1, 1], [], []>} : vector<8x128xf32>, vector<128x128xf32>, vector<8x128xf32> -> vector<8x128xf32>
    %52 = arith.addf %50, %51 : vector<8x128xf32>
    %c96_i32_21 = arith.constant 96 : i32
    %53 = vector.broadcast %c96_i32_21 : i32 to vector<8x128xi32>
    %54 = arith.cmpi slt, %8, %53 : vector<8x128xi32>
    %55 = arith.negf %52 : vector<8x128xf32>
    %56 = math.exp %55 : vector<8x128xf32>
    %cst_22 = arith.constant 1.000000e+00 : f32
    %57 = vector.broadcast %cst_22 : f32 to vector<8x128xf32>
    %58 = arith.addf %57, %56 : vector<8x128xf32>
    %59 = arith.divf %57, %58 : vector<8x128xf32>
    %60 = math.tanh %52 : vector<8x128xf32>
    %61 = arith.select %54, %59, %60 : vector<8x128xi1>, vector<8x128xf32>
    %c96_i32_23 = arith.constant 96 : i32
    %62 = tpu.dynamic_rotate %61 by %c96_i32_23 dim 1 : vector<8x128xf32>, i32 -> vector<8x128xf32>
    %c64_i32_24 = arith.constant 64 : i32
    %63 = tpu.dynamic_rotate %61 by %c64_i32_24 dim 1 : vector<8x128xf32>, i32 -> vector<8x128xf32>
    %c32_i32_25 = arith.constant 32 : i32
    %64 = tpu.dynamic_rotate %61 by %c32_i32_25 dim 1 : vector<8x128xf32>, i32 -> vector<8x128xf32>
    %65 = arith.mulf %62, %47 : vector<8x128xf32>
    %66 = arith.mulf %61, %64 : vector<8x128xf32>
    %67 = arith.addf %65, %66 : vector<8x128xf32>
    %68 = math.tanh %67 : vector<8x128xf32>
    %69 = arith.mulf %63, %68 : vector<8x128xf32>
    %70 = vector.extract_strided_slice %5 {offsets = [24, 0], sizes = [8, 128], strides = [1, 1]} : vector<64x128xf32> to vector<8x128xf32>
    %cst_26 = arith.constant dense<0.000000e+00> : vector<8x128xf32>
    %71 = tpu.matmul %69, %6, %cst_26 {dimension_numbers = #tpu.dot_dimension_numbers<[1], [0], [0], [1], [0, 0, 1, 1], [], []>} : vector<8x128xf32>, vector<128x128xf32>, vector<8x128xf32> -> vector<8x128xf32>
    %72 = arith.addf %70, %71 : vector<8x128xf32>
    %c96_i32_27 = arith.constant 96 : i32
    %73 = vector.broadcast %c96_i32_27 : i32 to vector<8x128xi32>
    %74 = arith.cmpi slt, %8, %73 : vector<8x128xi32>
    %75 = arith.negf %72 : vector<8x128xf32>
    %76 = math.exp %75 : vector<8x128xf32>
    %cst_28 = arith.constant 1.000000e+00 : f32
    %77 = vector.broadcast %cst_28 : f32 to vector<8x128xf32>
    %78 = arith.addf %77, %76 : vector<8x128xf32>
    %79 = arith.divf %77, %78 : vector<8x128xf32>
    %80 = math.tanh %72 : vector<8x128xf32>
    %81 = arith.select %74, %79, %80 : vector<8x128xi1>, vector<8x128xf32>
    %c96_i32_29 = arith.constant 96 : i32
    %82 = tpu.dynamic_rotate %81 by %c96_i32_29 dim 1 : vector<8x128xf32>, i32 -> vector<8x128xf32>
    %c64_i32_30 = arith.constant 64 : i32
    %83 = tpu.dynamic_rotate %81 by %c64_i32_30 dim 1 : vector<8x128xf32>, i32 -> vector<8x128xf32>
    %c32_i32_31 = arith.constant 32 : i32
    %84 = tpu.dynamic_rotate %81 by %c32_i32_31 dim 1 : vector<8x128xf32>, i32 -> vector<8x128xf32>
    %85 = arith.mulf %82, %67 : vector<8x128xf32>
    %86 = arith.mulf %81, %84 : vector<8x128xf32>
    %87 = arith.addf %85, %86 : vector<8x128xf32>
    %88 = math.tanh %87 : vector<8x128xf32>
    %89 = arith.mulf %83, %88 : vector<8x128xf32>
    %90 = vector.extract_strided_slice %5 {offsets = [32, 0], sizes = [8, 128], strides = [1, 1]} : vector<64x128xf32> to vector<8x128xf32>
    %cst_32 = arith.constant dense<0.000000e+00> : vector<8x128xf32>
    %91 = tpu.matmul %89, %6, %cst_32 {dimension_numbers = #tpu.dot_dimension_numbers<[1], [0], [0], [1], [0, 0, 1, 1], [], []>} : vector<8x128xf32>, vector<128x128xf32>, vector<8x128xf32> -> vector<8x128xf32>
    %92 = arith.addf %90, %91 : vector<8x128xf32>
    %c96_i32_33 = arith.constant 96 : i32
    %93 = vector.broadcast %c96_i32_33 : i32 to vector<8x128xi32>
    %94 = arith.cmpi slt, %8, %93 : vector<8x128xi32>
    %95 = arith.negf %92 : vector<8x128xf32>
    %96 = math.exp %95 : vector<8x128xf32>
    %cst_34 = arith.constant 1.000000e+00 : f32
    %97 = vector.broadcast %cst_34 : f32 to vector<8x128xf32>
    %98 = arith.addf %97, %96 : vector<8x128xf32>
    %99 = arith.divf %97, %98 : vector<8x128xf32>
    %100 = math.tanh %92 : vector<8x128xf32>
    %101 = arith.select %94, %99, %100 : vector<8x128xi1>, vector<8x128xf32>
    %c96_i32_35 = arith.constant 96 : i32
    %102 = tpu.dynamic_rotate %101 by %c96_i32_35 dim 1 : vector<8x128xf32>, i32 -> vector<8x128xf32>
    %c64_i32_36 = arith.constant 64 : i32
    %103 = tpu.dynamic_rotate %101 by %c64_i32_36 dim 1 : vector<8x128xf32>, i32 -> vector<8x128xf32>
    %c32_i32_37 = arith.constant 32 : i32
    %104 = tpu.dynamic_rotate %101 by %c32_i32_37 dim 1 : vector<8x128xf32>, i32 -> vector<8x128xf32>
    %105 = arith.mulf %102, %87 : vector<8x128xf32>
    %106 = arith.mulf %101, %104 : vector<8x128xf32>
    %107 = arith.addf %105, %106 : vector<8x128xf32>
    %108 = math.tanh %107 : vector<8x128xf32>
    %109 = arith.mulf %103, %108 : vector<8x128xf32>
    %110 = vector.extract_strided_slice %5 {offsets = [40, 0], sizes = [8, 128], strides = [1, 1]} : vector<64x128xf32> to vector<8x128xf32>
    %cst_38 = arith.constant dense<0.000000e+00> : vector<8x128xf32>
    %111 = tpu.matmul %109, %6, %cst_38 {dimension_numbers = #tpu.dot_dimension_numbers<[1], [0], [0], [1], [0, 0, 1, 1], [], []>} : vector<8x128xf32>, vector<128x128xf32>, vector<8x128xf32> -> vector<8x128xf32>
    %112 = arith.addf %110, %111 : vector<8x128xf32>
    %c96_i32_39 = arith.constant 96 : i32
    %113 = vector.broadcast %c96_i32_39 : i32 to vector<8x128xi32>
    %114 = arith.cmpi slt, %8, %113 : vector<8x128xi32>
    %115 = arith.negf %112 : vector<8x128xf32>
    %116 = math.exp %115 : vector<8x128xf32>
    %cst_40 = arith.constant 1.000000e+00 : f32
    %117 = vector.broadcast %cst_40 : f32 to vector<8x128xf32>
    %118 = arith.addf %117, %116 : vector<8x128xf32>
    %119 = arith.divf %117, %118 : vector<8x128xf32>
    %120 = math.tanh %112 : vector<8x128xf32>
    %121 = arith.select %114, %119, %120 : vector<8x128xi1>, vector<8x128xf32>
    %c96_i32_41 = arith.constant 96 : i32
    %122 = tpu.dynamic_rotate %121 by %c96_i32_41 dim 1 : vector<8x128xf32>, i32 -> vector<8x128xf32>
    %c64_i32_42 = arith.constant 64 : i32
    %123 = tpu.dynamic_rotate %121 by %c64_i32_42 dim 1 : vector<8x128xf32>, i32 -> vector<8x128xf32>
    %c32_i32_43 = arith.constant 32 : i32
    %124 = tpu.dynamic_rotate %121 by %c32_i32_43 dim 1 : vector<8x128xf32>, i32 -> vector<8x128xf32>
    %125 = arith.mulf %122, %107 : vector<8x128xf32>
    %126 = arith.mulf %121, %124 : vector<8x128xf32>
    %127 = arith.addf %125, %126 : vector<8x128xf32>
    %128 = math.tanh %127 : vector<8x128xf32>
    %129 = arith.mulf %123, %128 : vector<8x128xf32>
    %130 = vector.extract_strided_slice %5 {offsets = [48, 0], sizes = [8, 128], strides = [1, 1]} : vector<64x128xf32> to vector<8x128xf32>
    %cst_44 = arith.constant dense<0.000000e+00> : vector<8x128xf32>
    %131 = tpu.matmul %129, %6, %cst_44 {dimension_numbers = #tpu.dot_dimension_numbers<[1], [0], [0], [1], [0, 0, 1, 1], [], []>} : vector<8x128xf32>, vector<128x128xf32>, vector<8x128xf32> -> vector<8x128xf32>
    %132 = arith.addf %130, %131 : vector<8x128xf32>
    %c96_i32_45 = arith.constant 96 : i32
    %133 = vector.broadcast %c96_i32_45 : i32 to vector<8x128xi32>
    %134 = arith.cmpi slt, %8, %133 : vector<8x128xi32>
    %135 = arith.negf %132 : vector<8x128xf32>
    %136 = math.exp %135 : vector<8x128xf32>
    %cst_46 = arith.constant 1.000000e+00 : f32
    %137 = vector.broadcast %cst_46 : f32 to vector<8x128xf32>
    %138 = arith.addf %137, %136 : vector<8x128xf32>
    %139 = arith.divf %137, %138 : vector<8x128xf32>
    %140 = math.tanh %132 : vector<8x128xf32>
    %141 = arith.select %134, %139, %140 : vector<8x128xi1>, vector<8x128xf32>
    %c96_i32_47 = arith.constant 96 : i32
    %142 = tpu.dynamic_rotate %141 by %c96_i32_47 dim 1 : vector<8x128xf32>, i32 -> vector<8x128xf32>
    %c64_i32_48 = arith.constant 64 : i32
    %143 = tpu.dynamic_rotate %141 by %c64_i32_48 dim 1 : vector<8x128xf32>, i32 -> vector<8x128xf32>
    %c32_i32_49 = arith.constant 32 : i32
    %144 = tpu.dynamic_rotate %141 by %c32_i32_49 dim 1 : vector<8x128xf32>, i32 -> vector<8x128xf32>
    %145 = arith.mulf %142, %127 : vector<8x128xf32>
    %146 = arith.mulf %141, %144 : vector<8x128xf32>
    %147 = arith.addf %145, %146 : vector<8x128xf32>
    %148 = math.tanh %147 : vector<8x128xf32>
    %149 = arith.mulf %143, %148 : vector<8x128xf32>
    %150 = vector.extract_strided_slice %5 {offsets = [56, 0], sizes = [8, 128], strides = [1, 1]} : vector<64x128xf32> to vector<8x128xf32>
    %cst_50 = arith.constant dense<0.000000e+00> : vector<8x128xf32>
    %151 = tpu.matmul %149, %6, %cst_50 {dimension_numbers = #tpu.dot_dimension_numbers<[1], [0], [0], [1], [0, 0, 1, 1], [], []>} : vector<8x128xf32>, vector<128x128xf32>, vector<8x128xf32> -> vector<8x128xf32>
    %152 = arith.addf %150, %151 : vector<8x128xf32>
    %c96_i32_51 = arith.constant 96 : i32
    %153 = vector.broadcast %c96_i32_51 : i32 to vector<8x128xi32>
    %154 = arith.cmpi slt, %8, %153 : vector<8x128xi32>
    %155 = arith.negf %152 : vector<8x128xf32>
    %156 = math.exp %155 : vector<8x128xf32>
    %cst_52 = arith.constant 1.000000e+00 : f32
    %157 = vector.broadcast %cst_52 : f32 to vector<8x128xf32>
    %158 = arith.addf %157, %156 : vector<8x128xf32>
    %159 = arith.divf %157, %158 : vector<8x128xf32>
    %160 = math.tanh %152 : vector<8x128xf32>
    %161 = arith.select %154, %159, %160 : vector<8x128xi1>, vector<8x128xf32>
    %c96_i32_53 = arith.constant 96 : i32
    %162 = tpu.dynamic_rotate %161 by %c96_i32_53 dim 1 : vector<8x128xf32>, i32 -> vector<8x128xf32>
    %c64_i32_54 = arith.constant 64 : i32
    %163 = tpu.dynamic_rotate %161 by %c64_i32_54 dim 1 : vector<8x128xf32>, i32 -> vector<8x128xf32>
    %c32_i32_55 = arith.constant 32 : i32
    %164 = tpu.dynamic_rotate %161 by %c32_i32_55 dim 1 : vector<8x128xf32>, i32 -> vector<8x128xf32>
    %165 = arith.mulf %162, %147 : vector<8x128xf32>
    %166 = arith.mulf %161, %164 : vector<8x128xf32>
    %167 = arith.addf %165, %166 : vector<8x128xf32>
    %168 = math.tanh %167 : vector<8x128xf32>
    %169 = arith.mulf %163, %168 : vector<8x128xf32>
    %c16_i32 = arith.constant 16 : i32
    %170 = vector.broadcast %c16_i32 : i32 to vector<8x128xi32>
    %171 = arith.cmpi slt, %8, %170 : vector<8x128xi32>
    %cst_56 = arith.constant 0.000000e+00 : f32
    %172 = vector.broadcast %cst_56 : f32 to vector<8x128xf32>
    %173 = arith.select %171, %7, %172 : vector<8x128xi1>, vector<8x128xf32>
    %c16_i32_57 = arith.constant 16 : i32
    %174 = vector.broadcast %c16_i32_57 : i32 to vector<8x128xi32>
    %175 = arith.cmpi sge, %8, %174 : vector<8x128xi32>
    %cst_58 = arith.constant 0.000000e+00 : f32
    %176 = vector.broadcast %cst_58 : f32 to vector<8x128xf32>
    %177 = arith.select %175, %7, %176 : vector<8x128xi1>, vector<8x128xf32>
    %178 = arith.mulf %29, %173 : vector<8x128xf32>
    %179 = arith.mulf %169, %177 : vector<8x128xf32>
    %180 = arith.addf %178, %179 : vector<8x128xf32>
    %cst_59 = arith.constant dense<0.000000e+00> : vector<8xf32>
    %181 = vector.multi_reduction <add>, %180, %cst_59 [1] : vector<8x128xf32> to vector<8xf32>
    %182 = vector.shape_cast %181 : vector<8xf32> to vector<8x1xf32>
    %183 = arith.mulf %49, %173 : vector<8x128xf32>
    %184 = arith.mulf %149, %177 : vector<8x128xf32>
    %185 = arith.addf %183, %184 : vector<8x128xf32>
    %cst_60 = arith.constant dense<0.000000e+00> : vector<8xf32>
    %186 = vector.multi_reduction <add>, %185, %cst_60 [1] : vector<8x128xf32> to vector<8xf32>
    %187 = vector.shape_cast %186 : vector<8xf32> to vector<8x1xf32>
    %188 = arith.mulf %69, %173 : vector<8x128xf32>
    %189 = arith.mulf %129, %177 : vector<8x128xf32>
    %190 = arith.addf %188, %189 : vector<8x128xf32>
    %cst_61 = arith.constant dense<0.000000e+00> : vector<8xf32>
    %191 = vector.multi_reduction <add>, %190, %cst_61 [1] : vector<8x128xf32> to vector<8xf32>
    %192 = vector.shape_cast %191 : vector<8xf32> to vector<8x1xf32>
    %193 = arith.mulf %89, %173 : vector<8x128xf32>
    %194 = arith.mulf %109, %177 : vector<8x128xf32>
    %195 = arith.addf %193, %194 : vector<8x128xf32>
    %cst_62 = arith.constant dense<0.000000e+00> : vector<8xf32>
    %196 = vector.multi_reduction <add>, %195, %cst_62 [1] : vector<8x128xf32> to vector<8xf32>
    %197 = vector.shape_cast %196 : vector<8xf32> to vector<8x1xf32>
    %198 = arith.mulf %109, %173 : vector<8x128xf32>
    %199 = arith.mulf %89, %177 : vector<8x128xf32>
    %200 = arith.addf %198, %199 : vector<8x128xf32>
    %cst_63 = arith.constant dense<0.000000e+00> : vector<8xf32>
    %201 = vector.multi_reduction <add>, %200, %cst_63 [1] : vector<8x128xf32> to vector<8xf32>
    %202 = vector.shape_cast %201 : vector<8xf32> to vector<8x1xf32>
    %203 = arith.mulf %129, %173 : vector<8x128xf32>
    %204 = arith.mulf %69, %177 : vector<8x128xf32>
    %205 = arith.addf %203, %204 : vector<8x128xf32>
    %cst_64 = arith.constant dense<0.000000e+00> : vector<8xf32>
    %206 = vector.multi_reduction <add>, %205, %cst_64 [1] : vector<8x128xf32> to vector<8xf32>
    %207 = vector.shape_cast %206 : vector<8xf32> to vector<8x1xf32>
    %208 = arith.mulf %149, %173 : vector<8x128xf32>
    %209 = arith.mulf %49, %177 : vector<8x128xf32>
    %210 = arith.addf %208, %209 : vector<8x128xf32>
    %cst_65 = arith.constant dense<0.000000e+00> : vector<8xf32>
    %211 = vector.multi_reduction <add>, %210, %cst_65 [1] : vector<8x128xf32> to vector<8xf32>
    %212 = vector.shape_cast %211 : vector<8xf32> to vector<8x1xf32>
    %213 = arith.mulf %169, %173 : vector<8x128xf32>
    %214 = arith.mulf %29, %177 : vector<8x128xf32>
    %215 = arith.addf %213, %214 : vector<8x128xf32>
    %cst_66 = arith.constant dense<0.000000e+00> : vector<8xf32>
    %216 = vector.multi_reduction <add>, %215, %cst_66 [1] : vector<8x128xf32> to vector<8xf32>
    %217 = vector.shape_cast %216 : vector<8xf32> to vector<8x1xf32>
    %218 = arith.maximumf %182, %187 : vector<8x1xf32>
    %219 = arith.maximumf %218, %192 : vector<8x1xf32>
    %220 = arith.maximumf %219, %197 : vector<8x1xf32>
    %221 = arith.maximumf %220, %202 : vector<8x1xf32>
    %222 = arith.maximumf %221, %207 : vector<8x1xf32>
    %223 = arith.maximumf %222, %212 : vector<8x1xf32>
    %224 = arith.maximumf %223, %217 : vector<8x1xf32>
    %225 = arith.subf %182, %224 : vector<8x1xf32>
    %226 = math.exp %225 : vector<8x1xf32>
    %227 = arith.subf %187, %224 : vector<8x1xf32>
    %228 = math.exp %227 : vector<8x1xf32>
    %229 = arith.subf %192, %224 : vector<8x1xf32>
    %230 = math.exp %229 : vector<8x1xf32>
    %231 = arith.subf %197, %224 : vector<8x1xf32>
    %232 = math.exp %231 : vector<8x1xf32>
    %233 = arith.subf %202, %224 : vector<8x1xf32>
    %234 = math.exp %233 : vector<8x1xf32>
    %235 = arith.subf %207, %224 : vector<8x1xf32>
    %236 = math.exp %235 : vector<8x1xf32>
    %237 = arith.subf %212, %224 : vector<8x1xf32>
    %238 = math.exp %237 : vector<8x1xf32>
    %239 = arith.subf %217, %224 : vector<8x1xf32>
    %240 = math.exp %239 : vector<8x1xf32>
    %241 = arith.addf %226, %228 : vector<8x1xf32>
    %242 = arith.addf %241, %230 : vector<8x1xf32>
    %243 = arith.addf %242, %232 : vector<8x1xf32>
    %244 = arith.addf %243, %234 : vector<8x1xf32>
    %245 = arith.addf %244, %236 : vector<8x1xf32>
    %246 = arith.addf %245, %238 : vector<8x1xf32>
    %247 = arith.addf %246, %240 : vector<8x1xf32>
    %cst_67 = arith.constant 1.000000e+00 : f32
    %248 = vector.broadcast %cst_67 : f32 to vector<8x1xf32>
    %249 = arith.divf %248, %247 : vector<8x1xf32>
    %cst_68 = arith.constant 0.000000e+00 : f32
    %250 = vector.broadcast %cst_68 : f32 to vector<8x128xf32>
    %cst_69 = arith.constant 0.000000e+00 : f32
    %251 = vector.broadcast %cst_69 : f32 to vector<8x128xf32>
    %252 = arith.mulf %226, %249 : vector<8x1xf32>
    %253 = vector.broadcast %252 : vector<8x1xf32> to vector<8x128xf32>
    %254 = arith.mulf %253, %29 : vector<8x128xf32>
    %255 = arith.addf %250, %254 : vector<8x128xf32>
    %256 = vector.broadcast %252 : vector<8x1xf32> to vector<8x128xf32>
    %257 = arith.mulf %256, %169 : vector<8x128xf32>
    %258 = arith.addf %251, %257 : vector<8x128xf32>
    %259 = arith.mulf %228, %249 : vector<8x1xf32>
    %260 = vector.broadcast %259 : vector<8x1xf32> to vector<8x128xf32>
    %261 = arith.mulf %260, %49 : vector<8x128xf32>
    %262 = arith.addf %255, %261 : vector<8x128xf32>
    %263 = vector.broadcast %259 : vector<8x1xf32> to vector<8x128xf32>
    %264 = arith.mulf %263, %149 : vector<8x128xf32>
    %265 = arith.addf %258, %264 : vector<8x128xf32>
    %266 = arith.mulf %230, %249 : vector<8x1xf32>
    %267 = vector.broadcast %266 : vector<8x1xf32> to vector<8x128xf32>
    %268 = arith.mulf %267, %69 : vector<8x128xf32>
    %269 = arith.addf %262, %268 : vector<8x128xf32>
    %270 = vector.broadcast %266 : vector<8x1xf32> to vector<8x128xf32>
    %271 = arith.mulf %270, %129 : vector<8x128xf32>
    %272 = arith.addf %265, %271 : vector<8x128xf32>
    %273 = arith.mulf %232, %249 : vector<8x1xf32>
    %274 = vector.broadcast %273 : vector<8x1xf32> to vector<8x128xf32>
    %275 = arith.mulf %274, %89 : vector<8x128xf32>
    %276 = arith.addf %269, %275 : vector<8x128xf32>
    %277 = vector.broadcast %273 : vector<8x1xf32> to vector<8x128xf32>
    %278 = arith.mulf %277, %109 : vector<8x128xf32>
    %279 = arith.addf %272, %278 : vector<8x128xf32>
    %280 = arith.mulf %234, %249 : vector<8x1xf32>
    %281 = vector.broadcast %280 : vector<8x1xf32> to vector<8x128xf32>
    %282 = arith.mulf %281, %109 : vector<8x128xf32>
    %283 = arith.addf %276, %282 : vector<8x128xf32>
    %284 = vector.broadcast %280 : vector<8x1xf32> to vector<8x128xf32>
    %285 = arith.mulf %284, %89 : vector<8x128xf32>
    %286 = arith.addf %279, %285 : vector<8x128xf32>
    %287 = arith.mulf %236, %249 : vector<8x1xf32>
    %288 = vector.broadcast %287 : vector<8x1xf32> to vector<8x128xf32>
    %289 = arith.mulf %288, %129 : vector<8x128xf32>
    %290 = arith.addf %283, %289 : vector<8x128xf32>
    %291 = vector.broadcast %287 : vector<8x1xf32> to vector<8x128xf32>
    %292 = arith.mulf %291, %69 : vector<8x128xf32>
    %293 = arith.addf %286, %292 : vector<8x128xf32>
    %294 = arith.mulf %238, %249 : vector<8x1xf32>
    %295 = vector.broadcast %294 : vector<8x1xf32> to vector<8x128xf32>
    %296 = arith.mulf %295, %149 : vector<8x128xf32>
    %297 = arith.addf %290, %296 : vector<8x128xf32>
    %298 = vector.broadcast %294 : vector<8x1xf32> to vector<8x128xf32>
    %299 = arith.mulf %298, %49 : vector<8x128xf32>
    %300 = arith.addf %293, %299 : vector<8x128xf32>
    %301 = arith.mulf %240, %249 : vector<8x1xf32>
    %302 = vector.broadcast %301 : vector<8x1xf32> to vector<8x128xf32>
    %303 = arith.mulf %302, %169 : vector<8x128xf32>
    %304 = arith.addf %297, %303 : vector<8x128xf32>
    %305 = vector.broadcast %301 : vector<8x1xf32> to vector<8x128xf32>
    %306 = arith.mulf %305, %29 : vector<8x128xf32>
    %307 = arith.addf %300, %306 : vector<8x128xf32>
    %c0_70 = arith.constant 0 : index
    %c0_71 = arith.constant 0 : index
    %308 = vector.load %arg6[%c0_70, %c0_71] : memref<128x128xf32, #tpu.memory_space<vmem>>, vector<128x128xf32>
    %cst_72 = arith.constant dense<0.000000e+00> : vector<8x128xf32>
    %309 = tpu.matmul %304, %308, %cst_72 {dimension_numbers = #tpu.dot_dimension_numbers<[1], [0], [0], [1], [0, 0, 1, 1], [], []>} : vector<8x128xf32>, vector<128x128xf32>, vector<8x128xf32> -> vector<8x128xf32>
    %c0_73 = arith.constant 0 : index
    %c0_74 = arith.constant 0 : index
    %310 = vector.load %arg7[%c0_73, %c0_74] : memref<128x128xf32, #tpu.memory_space<vmem>>, vector<128x128xf32>
    %cst_75 = arith.constant dense<0.000000e+00> : vector<8x128xf32>
    %311 = tpu.matmul %307, %310, %cst_75 {dimension_numbers = #tpu.dot_dimension_numbers<[1], [0], [0], [1], [0, 0, 1, 1], [], []>} : vector<8x128xf32>, vector<128x128xf32>, vector<8x128xf32> -> vector<8x128xf32>
    %312 = arith.addf %309, %311 : vector<8x128xf32>
    %c0_76 = arith.constant 0 : index
    %c0_77 = arith.constant 0 : index
    %313 = vector.load %arg8[%c0_76, %c0_77] : memref<1x128xf32, #tpu.memory_space<vmem>>, vector<1x128xf32>
    %314 = vector.broadcast %313 : vector<1x128xf32> to vector<8x128xf32>
    %315 = arith.addf %312, %314 : vector<8x128xf32>
    %c0_78 = arith.constant 0 : index
    %c0_79 = arith.constant 0 : index
    %316 = vector.load %arg9[%c0_78, %c0_79] : memref<8x128xf32, #tpu.memory_space<vmem>>, vector<8x128xf32>
    tpu.vector_store %arg9[%c0_78, %c0_79], %315 {strides = array<i32>} : memref<8x128xf32, #tpu.memory_space<vmem>>, vector<8x128xf32>,
    return
  }
}

</mosaic_0001>

<llo_original>
// kernel: tpu_custom_call.1
$region0: #{tpu_custom_call.1}
  #allocation0 [shape = 'u32[]', space=smem, size = 0x4, offset = 0x4, fixed_abs, tag = 'smem constant byte address 0x4 - core index']
  #allocation1 [shape = 'u32[72,128]{1,0:T(1,128)}', space=vmem, size = 0x9000, scoped, tag = 'internal scratch']
  %s0 = inlined_call_operand.vmem [shape: f32[64,32], index: 0, kind: input, shape index: {}]
  %s1 = inlined_call_operand.vmem [shape: f32[32,128], index: 1, kind: input, shape index: {}]
  %s2 = inlined_call_operand.hbm [shape: f32[128,128], index: 2, kind: input, shape index: {}]
  %s3 = inlined_call_operand.vmem [shape: f32[1,128], index: 3, kind: input, shape index: {}]
  %s4 = inlined_call_operand.vmem [shape: f32[8,128], index: 4, kind: input, shape index: {}]
  %s5 = inlined_call_operand.vmem [shape: f32[8,128], index: 5, kind: input, shape index: {}]
  %s6 = inlined_call_operand.hbm [shape: f32[128,128], index: 6, kind: input, shape index: {}]
  %s7 = inlined_call_operand.hbm [shape: f32[128,128], index: 7, kind: input, shape index: {}]
  %s8 = inlined_call_operand.vmem [shape: f32[1,128], index: 8, kind: input, shape index: {}]
  %s9 = inlined_call_operand.hbm [shape: f32[8,128], index: 9, kind: output, shape index: {}]
  %s10 = sld [smem:[#allocation0]]
  $region58: #{tpu_custom_call.1} parent=0
    _
  %s12 = ssub.s32 1, %s10
  %s13 = scalar_select 0, %s12, %s10
  $region1: #{tpu_custom_call.1} parent=0
    #allocation2 [shape = 'u8[65536]{0}', space=vmem, size = 0x10000, scoped, tag = 'input window, operand 2, single buffered']
    #allocation3 [shape = 's32[1]{0}', space=sflag, size = 0x4, scoped, tag = 'scoped memory for tpu_custom_call.1']
    #allocation4 [shape = 's32[1]{0}', space=sflag, size = 0x4, scoped, tag = 'scoped memory for tpu_custom_call.1']
    #allocation5 [shape = 'u8[65536]{0}', space=vmem, size = 0x10000, scoped, tag = 'input window, operand 6, single buffered']
    #allocation6 [shape = 's32[1]{0}', space=sflag, size = 0x4, scoped, tag = 'scoped memory for tpu_custom_call.1']
    #allocation7 [shape = 'u8[65536]{0}', space=vmem, size = 0x10000, scoped, tag = 'input window, operand 7, single buffered']
    #allocation8 [shape = 'u8[4096]{0}', space=vmem, size = 0x1000, scoped, tag = 'output window, operand 0, single buffered']
    %14 = vsyncpa [#allocation3], 0
    %15 = vsyncpa [#allocation6], 0
    %16 = vsyncpa [#allocation4], 0
    // Predicated region
    $region2: #{tpu_custom_call.1} parent=1 // pred_check
      _
    $region3: #{tpu_custom_call.1} parent=1 // pred_check_branch
      %18 = sbr.rel (0) target = $region5
    $region4: #{tpu_custom_call.1} parent=1 // pred_region
      _
    $region5: #{tpu_custom_call.1} parent=1 // pred_fallthru
      _
    // Predicated region
    $region6: #{tpu_custom_call.1} parent=1 // pred_check
      _
    $region7: #{tpu_custom_call.1} parent=1 // pred_check_branch
      %20 = sbr.rel (0) target = $region9
    $region8: #{tpu_custom_call.1} parent=1 // pred_region
      _
    $region9: #{tpu_custom_call.1} parent=1 // pred_fallthru
      _
    // Predicated region
    $region10: #{tpu_custom_call.1} parent=1 // pred_check
      _
    $region11: #{tpu_custom_call.1} parent=1 // pred_check_branch
      %22 = sbr.rel (0) target = $region13
    $region12: #{tpu_custom_call.1} parent=1 // pred_region
      %24 = vsyncadd [#allocation3], 0
      %s25 = sshll.u32 %s2, 4
      %s26 = int_to_ptr.hbm [resolvable:$true] %s25
      %s27 = sshll.u32 [#allocation2], 4
      %s28 = int_to_ptr.vmem [resolvable:$true] %s27
      %33 = dma.hbm_to_vmem [thread:$0]  %s26, 2048, %s28, [#allocation3], 128, 128, 8
    $region13: #{tpu_custom_call.1} parent=1 // pred_fallthru
      _
    // Predicated region
    $region14: #{tpu_custom_call.1} parent=1 // pred_check
      _
    $region15: #{tpu_custom_call.1} parent=1 // pred_check_branch
      %35 = sbr.rel (0) target = $region17
    $region16: #{tpu_custom_call.1} parent=1 // pred_region
      _
    $region17: #{tpu_custom_call.1} parent=1 // pred_fallthru
      _
    // Predicated region
    $region18: #{tpu_custom_call.1} parent=1 // pred_check
      _
    $region19: #{tpu_custom_call.1} parent=1 // pred_check_branch
      %37 = sbr.rel (0) target = $region21
    $region20: #{tpu_custom_call.1} parent=1 // pred_region
      _
    $region21: #{tpu_custom_call.1} parent=1 // pred_fallthru
      _
    // Predicated region
    $region22: #{tpu_custom_call.1} parent=1 // pred_check
      _
    $region23: #{tpu_custom_call.1} parent=1 // pred_check_branch
      %39 = sbr.rel (0) target = $region25
    $region24: #{tpu_custom_call.1} parent=1 // pred_region
      _
    $region25: #{tpu_custom_call.1} parent=1 // pred_fallthru
      _
    // Predicated region
    $region26: #{tpu_custom_call.1} parent=1 // pred_check
      _
    $region27: #{tpu_custom_call.1} parent=1 // pred_check_branch
      %41 = sbr.rel (0) target = $region29
    $region28: #{tpu_custom_call.1} parent=1 // pred_region
      %43 = vsyncadd [#allocation6], 0
      %s44 = sshll.u32 %s6, 4
      %s45 = int_to_ptr.hbm [resolvable:$true] %s44
      %s46 = sshll.u32 [#allocation5], 4
      %s47 = int_to_ptr.vmem [resolvable:$true] %s46
      %52 = dma.hbm_to_vmem [thread:$0]  %s45, 2048, %s47, [#allocation6], 128, 128, 8
    $region29: #{tpu_custom_call.1} parent=1 // pred_fallthru
      _
    // Predicated region
    $region30: #{tpu_custom_call.1} parent=1 // pred_check
      _
    $region31: #{tpu_custom_call.1} parent=1 // pred_check_branch
      %54 = sbr.rel (0) target = $region33
    $region32: #{tpu_custom_call.1} parent=1 // pred_region
      %56 = vsyncadd [#allocation6], 0
      %s57 = sshll.u32 %s7, 4
      %s58 = int_to_ptr.hbm [resolvable:$true] %s57
      %s59 = sshll.u32 [#allocation7], 4
      %s60 = int_to_ptr.vmem [resolvable:$true] %s59
      %65 = dma.hbm_to_vmem [thread:$0]  %s58, 2048, %s60, [#allocation6], 128, 128, 8
    $region33: #{tpu_custom_call.1} parent=1 // pred_fallthru
      _
    // Predicated region
    $region34: #{tpu_custom_call.1} parent=1 // pred_check
      _
    $region35: #{tpu_custom_call.1} parent=1 // pred_check_branch
      %67 = sbr.rel (0) target = $region37
    $region36: #{tpu_custom_call.1} parent=1 // pred_region
      _
    $region37: #{tpu_custom_call.1} parent=1 // pred_fallthru
      _
    // Predicated region
    $region38: #{tpu_custom_call.1} parent=1 // pred_check
      _
    $region39: #{tpu_custom_call.1} parent=1 // pred_check_branch
      %69 = sbr.rel (0) target = $region41
    $region40: #{tpu_custom_call.1} parent=1 // pred_region
      %71 = dma.done [#allocation3], 2048
    $region41: #{tpu_custom_call.1} parent=1 // pred_fallthru
      _
    // Predicated region
    $region42: #{tpu_custom_call.1} parent=1 // pred_check
      _
    $region43: #{tpu_custom_call.1} parent=1 // pred_check_branch
      %73 = sbr.rel (0) target = $region45
    $region44: #{tpu_custom_call.1} parent=1 // pred_region
      %75 = dma.done [#allocation6], 2048
    $region45: #{tpu_custom_call.1} parent=1 // pred_fallthru
      _
    // Predicated region
    $region46: #{tpu_custom_call.1} parent=1 // pred_check
      _
    $region47: #{tpu_custom_call.1} parent=1 // pred_check_branch
      %77 = sbr.rel (0) target = $region49
    $region48: #{tpu_custom_call.1} parent=1 // pred_region
      %79 = dma.done [#allocation6], 2048
    $region49: #{tpu_custom_call.1} parent=1 // pred_fallthru
      _
    %v80 = vld [vmem:[%s0] sm:$0xff]
    %v81 = vld [vmem:[%s0 + $0x8] sm:$0xff]
    %v82 = vld [vmem:[%s0 + $0x10] sm:$0xff]
    %v83 = vld [vmem:[%s0 + $0x18] sm:$0xff]
    %v84 = vld [vmem:[%s0 + $0x20] sm:$0xff]
    %v85 = vld [vmem:[%s0 + $0x28] sm:$0xff]
    %v86 = vld [vmem:[%s0 + $0x30] sm:$0xff]
    %v87 = vld [vmem:[%s0 + $0x38] sm:$0xff]
    %v88 = vld [vmem:[%s1] sm:$0xff]
    %v89 = vld [vmem:[%s1 + $0x8] sm:$0xff]
    %v90 = vld [vmem:[%s1 + $0x10] sm:$0xff]
    %v91 = vld [vmem:[%s1 + $0x18] sm:$0xff]
    %v92 = vld [vmem:[%s3] sm:$0x1]
    %v94 = vperm.slane %v92, 0
    %vm96 = vcmask 261120
    %v98 = vsel %vm96, %v80, 0
    %v101 = vsel %vm96, %v81, 0
    %v104 = vsel %vm96, %v82, 0
    %v107 = vsel %vm96, %v83, 0
    %v110 = vsel %vm96, %v84, 0
    %v113 = vsel %vm96, %v85, 0
    %v116 = vsel %vm96, %v86, 0
    %v119 = vsel %vm96, %v87, 0
    %121 = vmatpush.msra.mxu0 0.0
    %122 = vmatpush.msra.mxu0 0.0
    %123 = vmatpush.msra.mxu0 0.0
    %124 = vmatpush.msra.mxu0 0.0
    %125 = vmatpush.msra.mxu0 0.0
    %126 = vmatpush.msra.mxu0 0.0
    %127 = vmatpush.msra.mxu0 0.0
    %128 = vmatpush.msra.mxu0 0.0
    %129 = vmatpush.msra.mxu0 0.0
    %130 = vmatpush.msra.mxu0 0.0
    %131 = vmatpush.msra.mxu0 0.0
    %132 = vmatpush.msra.mxu0 0.0
    %133 = vmatpush.msra.mxu0 %v91
    %134 = vmatpush.msra.mxu0 %v90
    %135 = vmatpush.msra.mxu0 %v89
    %136 = vmatpush.msra.mxu0 %v88
    %137 = vmatmul.f32.gmra.mxu0 %v98
    %v138 = vpop.f32.mrf.mxu0
    %v139 = vadd.f32 %v94, %v138
    %140 = vmatmul.f32.gmra.mxu0 %v101
    %v141 = vpop.f32.mrf.mxu0
    %v142 = vadd.f32 %v94, %v141
    %143 = vmatmul.f32.gmra.mxu0 %v104
    %v144 = vpop.f32.mrf.mxu0
    %v145 = vadd.f32 %v94, %v144
    %146 = vmatmul.f32.gmra.mxu0 %v107
    %v147 = vpop.f32.mrf.mxu0
    %v148 = vadd.f32 %v94, %v147
    %149 = vmatmul.f32.gmra.mxu0 %v110
    %v150 = vpop.f32.mrf.mxu0
    %v151 = vadd.f32 %v94, %v150
    %152 = vmatmul.f32.gmra.mxu0 %v113
    %v153 = vpop.f32.mrf.mxu0
    %v154 = vadd.f32 %v94, %v153
    %155 = vmatmul.f32.gmra.mxu0 %v116
    %v156 = vpop.f32.mrf.mxu0
    %v157 = vadd.f32 %v94, %v156
    %158 = vmatmul.f32.gmra.mxu0 %v119
    %v159 = vpop.f32.mrf.mxu0
    %v160 = vadd.f32 %v94, %v159
    %161 = vdwg.mxu0
    %v162 = vld [vmem:[#allocation2] sm:$0xff]
    %v163 = vld [vmem:[#allocation2 + $0x8] sm:$0xff]
    %v164 = vld [vmem:[#allocation2 + $0x10] sm:$0xff]
    %v165 = vld [vmem:[#allocation2 + $0x18] sm:$0xff]
    %v166 = vld [vmem:[#allocation2 + $0x20] sm:$0xff]
    %v167 = vld [vmem:[#allocation2 + $0x28] sm:$0xff]
    %v168 = vld [vmem:[#allocation2 + $0x30] sm:$0xff]
    %v169 = vld [vmem:[#allocation2 + $0x38] sm:$0xff]
    %v170 = vld [vmem:[#allocation2 + $0x40] sm:$0xff]
    %v171 = vld [vmem:[#allocation2 + $0x48] sm:$0xff]
    %v172 = vld [vmem:[#allocation2 + $0x50] sm:$0xff]
    %v173 = vld [vmem:[#allocation2 + $0x58] sm:$0xff]
    %v174 = vld [vmem:[#allocation2 + $0x60] sm:$0xff]
    %v175 = vld [vmem:[#allocation2 + $0x68] sm:$0xff]
    %v176 = vld [vmem:[#allocation2 + $0x70] sm:$0xff]
    %v177 = vld [vmem:[#allocation2 + $0x78] sm:$0xff]
    %v178 = vld [vmem:[%s4] sm:$0xff]
    %v179 = vlaneseq
    %v180 = vand.u32 %v179, 127
    %v181 = vld [vmem:[%s5] sm:$0xff]
    %182 = vmatpush.msra.mxu0 %v177
    %183 = vmatpush.msra.mxu0 %v176
    %184 = vmatpush.msra.mxu0 %v175
    %185 = vmatpush.msra.mxu0 %v174
    %186 = vmatpush.msra.mxu0 %v173
    %187 = vmatpush.msra.mxu0 %v172
    %188 = vmatpush.msra.mxu0 %v171
    %189 = vmatpush.msra.mxu0 %v170
    %190 = vmatpush.msra.mxu0 %v169
    %191 = vmatpush.msra.mxu0 %v168
    %192 = vmatpush.msra.mxu0 %v167
    %193 = vmatpush.msra.mxu0 %v166
    %194 = vmatpush.msra.mxu0 %v165
    %195 = vmatpush.msra.mxu0 %v164
    %196 = vmatpush.msra.mxu0 %v163
    %197 = vmatpush.msra.mxu0 %v162
    %198 = vmatmul.f32.gmra.mxu0 %v178
    %v199 = vpop.f32.mrf.mxu0
    %v200 = vadd.f32 0.0, %v199
    %201 = vdwg.mxu0
    %v202 = vadd.f32 %v139, %v200
    %vm203 = vcmp.lt.s32.totalorder %v180, 96
    %v204 = vxor.u32 %v202, 2147483648
    %v205 = vmul.f32 %v204, 1.442695
    %v206 = vpow.pop %v205
    %v207 = vadd.f32 %v206, 1.0
    %v208 = vrcp.pop %v207
    %v209 = vmul.f32 %v207, %v208
    %v210 = vsub.f32 1.0, %v209
    %v211 = vmul.f32 %v208, %v210
    %v212 = vadd.f32 %v208, %v211
    %vm213 = vweird.f32 %v207
    %vm214 = vweird.f32 %v208
    %vm215 = vmor %vm213, %vm214
    %v216 = vsel %vm215, %v208, %v212
    %v217 = vand.u32 2147483647, %v207
    %vm218 = vcmp.eq.f32.partialorder %v217, 8.507059e+37
    %v219 = vand.u32 %v207, 2147483648
    %v220 = vor.u32 1.1754944e-38, %v219
    %v221 = vsel %vm218, %v220, %v216
    %v222 = vmul.f32 1.0, %v221
    %v223 = vtanh.pop %v202
    %v224 = vsel %vm203, %v222, %v223
    %225 = vrot.lane.b32.xlu0 %v224, 96
    %v226 = vpop.permute.xlu0 %225
    %227 = vrot.lane.b32.xlu0 %v224, 64
    %v228 = vpop.permute.xlu0 %227
    %229 = vrot.lane.b32.xlu0 %v224, 32
    %v230 = vpop.permute.xlu0 %229
    %v231 = vmul.f32 %v226, %v181
    %v232 = vmul.f32 %v224, %v230
    %v233 = vadd.f32 %v231, %v232
    %v234 = vtanh.pop %v233
    %v235 = vmul.f32 %v228, %v234
    %236 = vmatpush.msra.mxu0 %v177
    %237 = vmatpush.msra.mxu0 %v176
    %238 = vmatpush.msra.mxu0 %v175
    %239 = vmatpush.msra.mxu0 %v174
    %240 = vmatpush.msra.mxu0 %v173
    %241 = vmatpush.msra.mxu0 %v172
    %242 = vmatpush.msra.mxu0 %v171
    %243 = vmatpush.msra.mxu0 %v170
    %244 = vmatpush.msra.mxu0 %v169
    %245 = vmatpush.msra.mxu0 %v168
    %246 = vmatpush.msra.mxu0 %v167
    %247 = vmatpush.msra.mxu0 %v166
    %248 = vmatpush.msra.mxu0 %v165
    %249 = vmatpush.msra.mxu0 %v164
    %250 = vmatpush.msra.mxu0 %v163
    %251 = vmatpush.msra.mxu0 %v162
    %252 = vmatmul.f32.gmra.mxu0 %v235
    %v253 = vpop.f32.mrf.mxu0
    %v254 = vadd.f32 0.0, %v253
    %255 = vdwg.mxu0
    %v256 = vadd.f32 %v142, %v254
    %v257 = vxor.u32 %v256, 2147483648
    %v258 = vmul.f32 %v257, 1.442695
    %v259 = vpow.pop %v258
    %v260 = vadd.f32 %v259, 1.0
    %v261 = vrcp.pop %v260
    %v262 = vmul.f32 %v260, %v261
    %v263 = vsub.f32 1.0, %v262
    %v264 = vmul.f32 %v261, %v263
    %v265 = vadd.f32 %v261, %v264
    %vm266 = vweird.f32 %v260
    %vm267 = vweird.f32 %v261
    %vm268 = vmor %vm266, %vm267
    %v269 = vsel %vm268, %v261, %v265
    %v270 = vand.u32 2147483647, %v260
    %vm271 = vcmp.eq.f32.partialorder %v270, 8.507059e+37
    %v272 = vand.u32 %v260, 2147483648
    %v273 = vor.u32 1.1754944e-38, %v272
    %v274 = vsel %vm271, %v273, %v269
    %v275 = vmul.f32 1.0, %v274
    %v276 = vtanh.pop %v256
    %v277 = vsel %vm203, %v275, %v276
    %278 = vrot.lane.b32.xlu0 %v277, 96
    %v279 = vpop.permute.xlu0 %278
    %280 = vrot.lane.b32.xlu0 %v277, 64
    %v281 = vpop.permute.xlu0 %280
    %282 = vrot.lane.b32.xlu0 %v277, 32
    %v283 = vpop.permute.xlu0 %282
    %v284 = vmul.f32 %v279, %v233
    %v285 = vmul.f32 %v277, %v283
    %v286 = vadd.f32 %v284, %v285
    %v287 = vtanh.pop %v286
    %v288 = vmul.f32 %v281, %v287
    %289 = vmatpush.msra.mxu0 %v177
    %290 = vmatpush.msra.mxu0 %v176
    %291 = vmatpush.msra.mxu0 %v175
    %292 = vmatpush.msra.mxu0 %v174
    %293 = vmatpush.msra.mxu0 %v173
    %294 = vmatpush.msra.mxu0 %v172
    %295 = vmatpush.msra.mxu0 %v171
    %296 = vmatpush.msra.mxu0 %v170
    %297 = vmatpush.msra.mxu0 %v169
    %298 = vmatpush.msra.mxu0 %v168
    %299 = vmatpush.msra.mxu0 %v167
    %300 = vmatpush.msra.mxu0 %v166
    %301 = vmatpush.msra.mxu0 %v165
    %302 = vmatpush.msra.mxu0 %v164
    %303 = vmatpush.msra.mxu0 %v163
    %304 = vmatpush.msra.mxu0 %v162
    %305 = vmatmul.f32.gmra.mxu0 %v288
    %v306 = vpop.f32.mrf.mxu0
    %v307 = vadd.f32 0.0, %v306
    %308 = vdwg.mxu0
    %v309 = vadd.f32 %v145, %v307
    %v310 = vxor.u32 %v309, 2147483648
    %v311 = vmul.f32 %v310, 1.442695
    %v312 = vpow.pop %v311
    %v313 = vadd.f32 %v312, 1.0
    %v314 = vrcp.pop %v313
    %v315 = vmul.f32 %v313, %v314
    %v316 = vsub.f32 1.0, %v315
    %v317 = vmul.f32 %v314, %v316
    %v318 = vadd.f32 %v314, %v317
    %vm319 = vweird.f32 %v313
    %vm320 = vweird.f32 %v314
    %vm321 = vmor %vm319, %vm320
    %v322 = vsel %vm321, %v314, %v318
    %v323 = vand.u32 2147483647, %v313
    %vm324 = vcmp.eq.f32.partialorder %v323, 8.507059e+37
    %v325 = vand.u32 %v313, 2147483648
    %v326 = vor.u32 1.1754944e-38, %v325
    %v327 = vsel %vm324, %v326, %v322
    %v328 = vmul.f32 1.0, %v327
    %v329 = vtanh.pop %v309
    %v330 = vsel %vm203, %v328, %v329
    %331 = vrot.lane.b32.xlu0 %v330, 96
    %v332 = vpop.permute.xlu0 %331
    %333 = vrot.lane.b32.xlu0 %v330, 64
    %v334 = vpop.permute.xlu0 %333
    %335 = vrot.lane.b32.xlu0 %v330, 32
    %v336 = vpop.permute.xlu0 %335
    %v337 = vmul.f32 %v332, %v286
    %v338 = vmul.f32 %v330, %v336
    %v339 = vadd.f32 %v337, %v338
    %v340 = vtanh.pop %v339
    %v341 = vmul.f32 %v334, %v340
    %342 = vmatpush.msra.mxu0 %v177
    %343 = vmatpush.msra.mxu0 %v176
    %344 = vmatpush.msra.mxu0 %v175
    %345 = vmatpush.msra.mxu0 %v174
    %346 = vmatpush.msra.mxu0 %v173
    %347 = vmatpush.msra.mxu0 %v172
    %348 = vmatpush.msra.mxu0 %v171
    %349 = vmatpush.msra.mxu0 %v170
    %350 = vmatpush.msra.mxu0 %v169
    %351 = vmatpush.msra.mxu0 %v168
    %352 = vmatpush.msra.mxu0 %v167
    %353 = vmatpush.msra.mxu0 %v166
    %354 = vmatpush.msra.mxu0 %v165
    %355 = vmatpush.msra.mxu0 %v164
    %356 = vmatpush.msra.mxu0 %v163
    %357 = vmatpush.msra.mxu0 %v162
    %358 = vmatmul.f32.gmra.mxu0 %v341
    %v359 = vpop.f32.mrf.mxu0
    %v360 = vadd.f32 0.0, %v359
    %361 = vdwg.mxu0
    %v362 = vadd.f32 %v148, %v360
    %v363 = vxor.u32 %v362, 2147483648
    %v364 = vmul.f32 %v363, 1.442695
    %v365 = vpow.pop %v364
    %v366 = vadd.f32 %v365, 1.0
    %v367 = vrcp.pop %v366
    %v368 = vmul.f32 %v366, %v367
    %v369 = vsub.f32 1.0, %v368
    %v370 = vmul.f32 %v367, %v369
    %v371 = vadd.f32 %v367, %v370
    %vm372 = vweird.f32 %v366
    %vm373 = vweird.f32 %v367
    %vm374 = vmor %vm372, %vm373
    %v375 = vsel %vm374, %v367, %v371
    %v376 = vand.u32 2147483647, %v366
    %vm377 = vcmp.eq.f32.partialorder %v376, 8.507059e+37
    %v378 = vand.u32 %v366, 2147483648
    %v379 = vor.u32 1.1754944e-38, %v378
    %v380 = vsel %vm377, %v379, %v375
    %v381 = vmul.f32 1.0, %v380
    %v382 = vtanh.pop %v362
    %v383 = vsel %vm203, %v381, %v382
    %384 = vrot.lane.b32.xlu0 %v383, 96
    %v385 = vpop.permute.xlu0 %384
    %386 = vrot.lane.b32.xlu0 %v383, 64
    %v387 = vpop.permute.xlu0 %386
    %388 = vrot.lane.b32.xlu0 %v383, 32
    %v389 = vpop.permute.xlu0 %388
    %v390 = vmul.f32 %v385, %v339
    %v391 = vmul.f32 %v383, %v389
    %v392 = vadd.f32 %v390, %v391
    %v393 = vtanh.pop %v392
    %v394 = vmul.f32 %v387, %v393
    %395 = vmatpush.msra.mxu0 %v177
    %396 = vmatpush.msra.mxu0 %v176
    %397 = vmatpush.msra.mxu0 %v175
    %398 = vmatpush.msra.mxu0 %v174
    %399 = vmatpush.msra.mxu0 %v173
    %400 = vmatpush.msra.mxu0 %v172
    %401 = vmatpush.msra.mxu0 %v171
    %402 = vmatpush.msra.mxu0 %v170
    %403 = vmatpush.msra.mxu0 %v169
    %404 = vmatpush.msra.mxu0 %v168
    %405 = vmatpush.msra.mxu0 %v167
    %406 = vmatpush.msra.mxu0 %v166
    %407 = vmatpush.msra.mxu0 %v165
    %408 = vmatpush.msra.mxu0 %v164
    %409 = vmatpush.msra.mxu0 %v163
    %410 = vmatpush.msra.mxu0 %v162
    %411 = vmatmul.f32.gmra.mxu0 %v394
    %v412 = vpop.f32.mrf.mxu0
    %v413 = vadd.f32 0.0, %v412
    %414 = vdwg.mxu0
    %v415 = vadd.f32 %v151, %v413
    %v416 = vxor.u32 %v415, 2147483648
    %v417 = vmul.f32 %v416, 1.442695
    %v418 = vpow.pop %v417
    %v419 = vadd.f32 %v418, 1.0
    %v420 = vrcp.pop %v419
    %v421 = vmul.f32 %v419, %v420
    %v422 = vsub.f32 1.0, %v421
    %v423 = vmul.f32 %v420, %v422
    %v424 = vadd.f32 %v420, %v423
    %vm425 = vweird.f32 %v419
    %vm426 = vweird.f32 %v420
    %vm427 = vmor %vm425, %vm426
    %v428 = vsel %vm427, %v420, %v424
    %v429 = vand.u32 2147483647, %v419
    %vm430 = vcmp.eq.f32.partialorder %v429, 8.507059e+37
    %v431 = vand.u32 %v419, 2147483648
    %v432 = vor.u32 1.1754944e-38, %v431
    %v433 = vsel %vm430, %v432, %v428
    %v434 = vmul.f32 1.0, %v433
    %v435 = vtanh.pop %v415
    %v436 = vsel %vm203, %v434, %v435
    %437 = vrot.lane.b32.xlu0 %v436, 96
    %v438 = vpop.permute.xlu0 %437
    %439 = vrot.lane.b32.xlu0 %v436, 64
    %v440 = vpop.permute.xlu0 %439
    %441 = vrot.lane.b32.xlu0 %v436, 32
    %v442 = vpop.permute.xlu0 %441
    %v443 = vmul.f32 %v438, %v392
    %v444 = vmul.f32 %v436, %v442
    %v445 = vadd.f32 %v443, %v444
    %v446 = vtanh.pop %v445
    %v447 = vmul.f32 %v440, %v446
    %448 = vmatpush.msra.mxu0 %v177
    %449 = vmatpush.msra.mxu0 %v176
    %450 = vmatpush.msra.mxu0 %v175
    %451 = vmatpush.msra.mxu0 %v174
    %452 = vmatpush.msra.mxu0 %v173
    %453 = vmatpush.msra.mxu0 %v172
    %454 = vmatpush.msra.mxu0 %v171
    %455 = vmatpush.msra.mxu0 %v170
    %456 = vmatpush.msra.mxu0 %v169
    %457 = vmatpush.msra.mxu0 %v168
    %458 = vmatpush.msra.mxu0 %v167
    %459 = vmatpush.msra.mxu0 %v166
    %460 = vmatpush.msra.mxu0 %v165
    %461 = vmatpush.msra.mxu0 %v164
    %462 = vmatpush.msra.mxu0 %v163
    %463 = vmatpush.msra.mxu0 %v162
    %464 = vmatmul.f32.gmra.mxu0 %v447
    %v465 = vpop.f32.mrf.mxu0
    %v466 = vadd.f32 0.0, %v465
    %467 = vdwg.mxu0
    %v468 = vadd.f32 %v154, %v466
    %v469 = vxor.u32 %v468, 2147483648
    %v470 = vmul.f32 %v469, 1.442695
    %v471 = vpow.pop %v470
    %v472 = vadd.f32 %v471, 1.0
    %v473 = vrcp.pop %v472
    %v474 = vmul.f32 %v472, %v473
    %v475 = vsub.f32 1.0, %v474
    %v476 = vmul.f32 %v473, %v475
    %v477 = vadd.f32 %v473, %v476
    %vm478 = vweird.f32 %v472
    %vm479 = vweird.f32 %v473
    %vm480 = vmor %vm478, %vm479
    %v481 = vsel %vm480, %v473, %v477
    %v482 = vand.u32 2147483647, %v472
    %vm483 = vcmp.eq.f32.partialorder %v482, 8.507059e+37
    %v484 = vand.u32 %v472, 2147483648
    %v485 = vor.u32 1.1754944e-38, %v484
    %v486 = vsel %vm483, %v485, %v481
    %v487 = vmul.f32 1.0, %v486
    %v488 = vtanh.pop %v468
    %v489 = vsel %vm203, %v487, %v488
    %490 = vrot.lane.b32.xlu0 %v489, 96
    %v491 = vpop.permute.xlu0 %490
    %492 = vrot.lane.b32.xlu0 %v489, 64
    %v493 = vpop.permute.xlu0 %492
    %494 = vrot.lane.b32.xlu0 %v489, 32
    %v495 = vpop.permute.xlu0 %494
    %v496 = vmul.f32 %v491, %v445
    %v497 = vmul.f32 %v489, %v495
    %v498 = vadd.f32 %v496, %v497
    %v499 = vtanh.pop %v498
    %v500 = vmul.f32 %v493, %v499
    %501 = vmatpush.msra.mxu0 %v177
    %502 = vmatpush.msra.mxu0 %v176
    %503 = vmatpush.msra.mxu0 %v175
    %504 = vmatpush.msra.mxu0 %v174
    %505 = vmatpush.msra.mxu0 %v173
    %506 = vmatpush.msra.mxu0 %v172
    %507 = vmatpush.msra.mxu0 %v171
    %508 = vmatpush.msra.mxu0 %v170
    %509 = vmatpush.msra.mxu0 %v169
    %510 = vmatpush.msra.mxu0 %v168
    %511 = vmatpush.msra.mxu0 %v167
    %512 = vmatpush.msra.mxu0 %v166
    %513 = vmatpush.msra.mxu0 %v165
    %514 = vmatpush.msra.mxu0 %v164
    %515 = vmatpush.msra.mxu0 %v163
    %516 = vmatpush.msra.mxu0 %v162
    %517 = vmatmul.f32.gmra.mxu0 %v500
    %v518 = vpop.f32.mrf.mxu0
    %v519 = vadd.f32 0.0, %v518
    %520 = vdwg.mxu0
    %v521 = vadd.f32 %v157, %v519
    %v522 = vxor.u32 %v521, 2147483648
    %v523 = vmul.f32 %v522, 1.442695
    %v524 = vpow.pop %v523
    %v525 = vadd.f32 %v524, 1.0
    %v526 = vrcp.pop %v525
    %v527 = vmul.f32 %v525, %v526
    %v528 = vsub.f32 1.0, %v527
    %v529 = vmul.f32 %v526, %v528
    %v530 = vadd.f32 %v526, %v529
    %vm531 = vweird.f32 %v525
    %vm532 = vweird.f32 %v526
    %vm533 = vmor %vm531, %vm532
    %v534 = vsel %vm533, %v526, %v530
    %v535 = vand.u32 2147483647, %v525
    %vm536 = vcmp.eq.f32.partialorder %v535, 8.507059e+37
    %v537 = vand.u32 %v525, 2147483648
    %v538 = vor.u32 1.1754944e-38, %v537
    %v539 = vsel %vm536, %v538, %v534
    %v540 = vmul.f32 1.0, %v539
    %v541 = vtanh.pop %v521
    %v542 = vsel %vm203, %v540, %v541
    %543 = vrot.lane.b32.xlu0 %v542, 96
    %v544 = vpop.permute.xlu0 %543
    %545 = vrot.lane.b32.xlu0 %v542, 64
    %v546 = vpop.permute.xlu0 %545
    %547 = vrot.lane.b32.xlu0 %v542, 32
    %v548 = vpop.permute.xlu0 %547
    %v549 = vmul.f32 %v544, %v498
    %v550 = vmul.f32 %v542, %v548
    %v551 = vadd.f32 %v549, %v550
    %v552 = vtanh.pop %v551
    %v553 = vmul.f32 %v546, %v552
    %554 = vmatpush.msra.mxu0 %v177
    %555 = vmatpush.msra.mxu0 %v176
    %556 = vmatpush.msra.mxu0 %v175
    %557 = vmatpush.msra.mxu0 %v174
    %558 = vmatpush.msra.mxu0 %v173
    %559 = vmatpush.msra.mxu0 %v172
    %560 = vmatpush.msra.mxu0 %v171
    %561 = vmatpush.msra.mxu0 %v170
    %562 = vmatpush.msra.mxu0 %v169
    %563 = vmatpush.msra.mxu0 %v168
    %564 = vmatpush.msra.mxu0 %v167
    %565 = vmatpush.msra.mxu0 %v166
    %566 = vmatpush.msra.mxu0 %v165
    %567 = vmatpush.msra.mxu0 %v164
    %568 = vmatpush.msra.mxu0 %v163
    %569 = vmatpush.msra.mxu0 %v162
    %570 = vmatmul.f32.gmra.mxu0 %v553
    %v571 = vpop.f32.mrf.mxu0
    %v572 = vadd.f32 0.0, %v571
    %573 = vdwg.mxu0
    %v574 = vadd.f32 %v160, %v572
    %v575 = vxor.u32 %v574, 2147483648
    %v576 = vmul.f32 %v575, 1.442695
    %v577 = vpow.pop %v576
    %v578 = vadd.f32 %v577, 1.0
    %v579 = vrcp.pop %v578
    %v580 = vmul.f32 %v578, %v579
    %v581 = vsub.f32 1.0, %v580
    %v582 = vmul.f32 %v579, %v581
    %v583 = vadd.f32 %v579, %v582
    %vm584 = vweird.f32 %v578
    %vm585 = vweird.f32 %v579
    %vm586 = vmor %vm584, %vm585
    %v587 = vsel %vm586, %v579, %v583
    %v588 = vand.u32 2147483647, %v578
    %vm589 = vcmp.eq.f32.partialorder %v588, 8.507059e+37
    %v590 = vand.u32 %v578, 2147483648
    %v591 = vor.u32 1.1754944e-38, %v590
    %v592 = vsel %vm589, %v591, %v587
    %v593 = vmul.f32 1.0, %v592
    %v594 = vtanh.pop %v574
    %v595 = vsel %vm203, %v593, %v594
    %596 = vrot.lane.b32.xlu0 %v595, 96
    %v597 = vpop.permute.xlu0 %596
    %598 = vrot.lane.b32.xlu0 %v595, 64
    %v599 = vpop.permute.xlu0 %598
    %600 = vrot.lane.b32.xlu0 %v595, 32
    %v601 = vpop.permute.xlu0 %600
    %v602 = vmul.f32 %v597, %v551
    %v603 = vmul.f32 %v595, %v601
    %v604 = vadd.f32 %v602, %v603
    %v605 = vtanh.pop %v604
    %v606 = vmul.f32 %v599, %v605
    %vm607 = vcmp.lt.s32.totalorder %v180, 16
    %v608 = vsel %vm607, %v178, 0.0
    %vm609 = vcmp.ge.s32.totalorder %v180, 16
    %v610 = vsel %vm609, %v178, 0.0
    %v611 = vmul.f32 %v235, %v608
    %v612 = vmul.f32 %v606, %v610
    %v613 = vadd.f32 %v611, %v612
    %614 = vadd.xlane.f32.xlu0 %v613
    %v615 = vpop.xlane.xlu0 %614
    %v616 = vmul.f32 %v288, %v608
    %v617 = vmul.f32 %v553, %v610
    %v618 = vadd.f32 %v616, %v617
    %619 = vadd.xlane.f32.xlu0 %v618
    %v620 = vpop.xlane.xlu0 %619
    %v621 = vmul.f32 %v341, %v608
    %v622 = vmul.f32 %v500, %v610
    %v623 = vadd.f32 %v621, %v622
    %624 = vadd.xlane.f32.xlu0 %v623
    %v625 = vpop.xlane.xlu0 %624
    %v626 = vmul.f32 %v394, %v608
    %v627 = vmul.f32 %v447, %v610
    %v628 = vadd.f32 %v626, %v627
    %629 = vadd.xlane.f32.xlu0 %v628
    %v630 = vpop.xlane.xlu0 %629
    %v631 = vmul.f32 %v447, %v608
    %v632 = vmul.f32 %v394, %v610
    %v633 = vadd.f32 %v631, %v632
    %634 = vadd.xlane.f32.xlu0 %v633
    %v635 = vpop.xlane.xlu0 %634
    %v636 = vmul.f32 %v500, %v608
    %v637 = vmul.f32 %v341, %v610
    %v638 = vadd.f32 %v636, %v637
    %639 = vadd.xlane.f32.xlu0 %v638
    %v640 = vpop.xlane.xlu0 %639
    %v641 = vmul.f32 %v553, %v608
    %v642 = vmul.f32 %v288, %v610
    %v643 = vadd.f32 %v641, %v642
    %644 = vadd.xlane.f32.xlu0 %v643
    %v645 = vpop.xlane.xlu0 %644
    %v646 = vmul.f32 %v606, %v608
    %v647 = vmul.f32 %v235, %v610
    %v648 = vadd.f32 %v646, %v647
    %649 = vadd.xlane.f32.xlu0 %v648
    %v650 = vpop.xlane.xlu0 %649
    %v651 = vmax.f32 %v615, %v620
    %v652 = vmax.f32 %v651, %v625
    %v653 = vmax.f32 %v652, %v630
    %v654 = vmax.f32 %v653, %v635
    %v655 = vmax.f32 %v654, %v640
    %v656 = vmax.f32 %v655, %v645
    %v657 = vmax.f32 %v656, %v650
    %v658 = vsub.f32 %v615, %v657
    %v659 = vmul.f32 %v658, 1.442695
    %v660 = vpow.pop %v659
    %v661 = vsub.f32 %v620, %v657
    %v662 = vmul.f32 %v661, 1.442695
    %v663 = vpow.pop %v662
    %v664 = vsub.f32 %v625, %v657
    %v665 = vmul.f32 %v664, 1.442695
    %v666 = vpow.pop %v665
    %v667 = vsub.f32 %v630, %v657
    %v668 = vmul.f32 %v667, 1.442695
    %v669 = vpow.pop %v668
    %v670 = vsub.f32 %v635, %v657
    %v671 = vmul.f32 %v670, 1.442695
    %v672 = vpow.pop %v671
    %v673 = vsub.f32 %v640, %v657
    %v674 = vmul.f32 %v673, 1.442695
    %v675 = vpow.pop %v674
    %v676 = vsub.f32 %v645, %v657
    %v677 = vmul.f32 %v676, 1.442695
    %v678 = vpow.pop %v677
    %v679 = vsub.f32 %v650, %v657
    %v680 = vmul.f32 %v679, 1.442695
    %v681 = vpow.pop %v680
    %v682 = vadd.f32 %v660, %v663
    %v683 = vadd.f32 %v682, %v666
    %v684 = vadd.f32 %v683, %v669
    %v685 = vadd.f32 %v684, %v672
    %v686 = vadd.f32 %v685, %v675
    %v687 = vadd.f32 %v686, %v678
    %v688 = vadd.f32 %v687, %v681
    %v689 = vrcp.pop %v688
    %v690 = vmul.f32 %v688, %v689
    %v691 = vsub.f32 1.0, %v690
    %v692 = vmul.f32 %v689, %v691
    %v693 = vadd.f32 %v689, %v692
    %vm694 = vweird.f32 %v688
    %vm695 = vweird.f32 %v689
    %vm696 = vmor %vm694, %vm695
    %v697 = vsel %vm696, %v689, %v693
    %v698 = vand.u32 2147483647, %v688
    %vm699 = vcmp.eq.f32.partialorder %v698, 8.507059e+37
    %v700 = vand.u32 %v688, 2147483648
    %v701 = vor.u32 1.1754944e-38, %v700
    %v702 = vsel %vm699, %v701, %v697
    %v703 = vmul.f32 1.0, %v702
    %v704 = vmul.f32 %v660, %v703
    %v705 = vmul.f32 %v704, %v235
    %v706 = vadd.f32 %v705, 0.0
    %v707 = vmul.f32 %v704, %v606
    %v708 = vadd.f32 %v707, 0.0
    %v709 = vmul.f32 %v663, %v703
    %v710 = vmul.f32 %v709, %v288
    %v711 = vadd.f32 %v706, %v710
    %v712 = vmul.f32 %v709, %v553
    %v713 = vadd.f32 %v708, %v712
    %v714 = vmul.f32 %v666, %v703
    %v715 = vmul.f32 %v714, %v341
    %v716 = vadd.f32 %v711, %v715
    %v717 = vmul.f32 %v714, %v500
    %v718 = vadd.f32 %v713, %v717
    %v719 = vmul.f32 %v669, %v703
    %v720 = vmul.f32 %v719, %v394
    %v721 = vadd.f32 %v716, %v720
    %v722 = vmul.f32 %v719, %v447
    %v723 = vadd.f32 %v718, %v722
    %v724 = vmul.f32 %v672, %v703
    %v725 = vmul.f32 %v724, %v447
    %v726 = vadd.f32 %v721, %v725
    %v727 = vmul.f32 %v724, %v394
    %v728 = vadd.f32 %v723, %v727
    %v729 = vmul.f32 %v675, %v703
    %v730 = vmul.f32 %v729, %v500
    %v731 = vadd.f32 %v726, %v730
    %v732 = vmul.f32 %v729, %v341
    %v733 = vadd.f32 %v728, %v732
    %v734 = vmul.f32 %v678, %v703
    %v735 = vmul.f32 %v734, %v553
    %v736 = vadd.f32 %v731, %v735
    %v737 = vmul.f32 %v734, %v288
    %v738 = vadd.f32 %v733, %v737
    %v739 = vmul.f32 %v681, %v703
    %v740 = vmul.f32 %v739, %v606
    %v741 = vadd.f32 %v736, %v740
    %v742 = vmul.f32 %v739, %v235
    %v743 = vadd.f32 %v738, %v742
    %v744 = vld [vmem:[#allocation5] sm:$0xff]
    %v745 = vld [vmem:[#allocation5 + $0x8] sm:$0xff]
    %v746 = vld [vmem:[#allocation5 + $0x10] sm:$0xff]
    %v747 = vld [vmem:[#allocation5 + $0x18] sm:$0xff]
    %v748 = vld [vmem:[#allocation5 + $0x20] sm:$0xff]
    %v749 = vld [vmem:[#allocation5 + $0x28] sm:$0xff]
    %v750 = vld [vmem:[#allocation5 + $0x30] sm:$0xff]
    %v751 = vld [vmem:[#allocation5 + $0x38] sm:$0xff]
    %v752 = vld [vmem:[#allocation5 + $0x40] sm:$0xff]
    %v753 = vld [vmem:[#allocation5 + $0x48] sm:$0xff]
    %v754 = vld [vmem:[#allocation5 + $0x50] sm:$0xff]
    %v755 = vld [vmem:[#allocation5 + $0x58] sm:$0xff]
    %v756 = vld [vmem:[#allocation5 + $0x60] sm:$0xff]
    %v757 = vld [vmem:[#allocation5 + $0x68] sm:$0xff]
    %v758 = vld [vmem:[#allocation5 + $0x70] sm:$0xff]
    %v759 = vld [vmem:[#allocation5 + $0x78] sm:$0xff]
    %v760 = vld [vmem:[#allocation7] sm:$0xff]
    %v761 = vld [vmem:[#allocation7 + $0x8] sm:$0xff]
    %v762 = vld [vmem:[#allocation7 + $0x10] sm:$0xff]
    %v763 = vld [vmem:[#allocation7 + $0x18] sm:$0xff]
    %v764 = vld [vmem:[#allocation7 + $0x20] sm:$0xff]
    %v765 = vld [vmem:[#allocation7 + $0x28] sm:$0xff]
    %v766 = vld [vmem:[#allocation7 + $0x30] sm:$0xff]
    %v767 = vld [vmem:[#allocation7 + $0x38] sm:$0xff]
    %v768 = vld [vmem:[#allocation7 + $0x40] sm:$0xff]
    %v769 = vld [vmem:[#allocation7 + $0x48] sm:$0xff]
    %v770 = vld [vmem:[#allocation7 + $0x50] sm:$0xff]
    %v771 = vld [vmem:[#allocation7 + $0x58] sm:$0xff]
    %v772 = vld [vmem:[#allocation7 + $0x60] sm:$0xff]
    %v773 = vld [vmem:[#allocation7 + $0x68] sm:$0xff]
    %v774 = vld [vmem:[#allocation7 + $0x70] sm:$0xff]
    %v775 = vld [vmem:[#allocation7 + $0x78] sm:$0xff]
    %776 = vmatpush.msra.mxu0 %v775
    %777 = vmatpush.msra.mxu0 %v774
    %778 = vmatpush.msra.mxu0 %v773
    %779 = vmatpush.msra.mxu0 %v772
    %780 = vmatpush.msra.mxu0 %v771
    %781 = vmatpush.msra.mxu0 %v770
    %782 = vmatpush.msra.mxu0 %v769
    %783 = vmatpush.msra.mxu0 %v768
    %784 = vmatpush.msra.mxu0 %v767
    %785 = vmatpush.msra.mxu0 %v766
    %786 = vmatpush.msra.mxu0 %v765
    %787 = vmatpush.msra.mxu0 %v764
    %788 = vmatpush.msra.mxu0 %v763
    %789 = vmatpush.msra.mxu0 %v762
    %790 = vmatpush.msra.mxu0 %v761
    %791 = vmatpush.msra.mxu0 %v760
    %792 = vmatmul.f32.gmra.mxu0 %v743
    %v793 = vpop.f32.mrf.mxu0
    %v794 = vadd.f32 0.0, %v793
    %795 = vdwg.mxu0
    %796 = vmatpush.msra.mxu0 %v759
    %797 = vmatpush.msra.mxu0 %v758
    %798 = vmatpush.msra.mxu0 %v757
    %799 = vmatpush.msra.mxu0 %v756
    %800 = vmatpush.msra.mxu0 %v755
    %801 = vmatpush.msra.mxu0 %v754
    %802 = vmatpush.msra.mxu0 %v753
    %803 = vmatpush.msra.mxu0 %v752
    %804 = vmatpush.msra.mxu0 %v751
    %805 = vmatpush.msra.mxu0 %v750
    %806 = vmatpush.msra.mxu0 %v749
    %807 = vmatpush.msra.mxu0 %v748
    %808 = vmatpush.msra.mxu0 %v747
    %809 = vmatpush.msra.mxu0 %v746
    %810 = vmatpush.msra.mxu0 %v745
    %811 = vmatpush.msra.mxu0 %v744
    %812 = vmatmul.f32.gmra.mxu0 %v741
    %v813 = vpop.f32.mrf.mxu0
    %v814 = vadd.f32 %v794, %v813
    %815 = vdwg.mxu0
    %v816 = vld [vmem:[%s8] sm:$0x1]
    %v818 = vperm.slane %v816, 0
    %v820 = vadd.f32 %v814, %v818
    %821 = vst [vmem:[#allocation8] sm:$0xff] %v820
    // Predicated region
    $region50: #{tpu_custom_call.1} parent=1 // pred_check
      _
    $region51: #{tpu_custom_call.1} parent=1 // pred_check_branch
      %823 = sbr.rel (0) target = $region53
    $region52: #{tpu_custom_call.1} parent=1 // pred_region
      %825 = vsyncadd [#allocation4], 0
      %s827 = sshll.u32 [#allocation8], 4
      %s828 = int_to_ptr.vmem [resolvable:$true] %s827
      %s829 = sshll.u32 %s9, 4
      %s830 = int_to_ptr.hbm [resolvable:$true] %s829
      %832 = dma.vmem_to_hbm [thread:$0]  %s828, 128, %s830, [#allocation4]
    $region53: #{tpu_custom_call.1} parent=1 // pred_fallthru
      _
    // Predicated region
    $region54: #{tpu_custom_call.1} parent=1 // pred_check
      _
    $region55: #{tpu_custom_call.1} parent=1 // pred_check_branch
      %834 = sbr.rel (0) target = $region57
    $region56: #{tpu_custom_call.1} parent=1 // pred_region
      %836 = dma.done [#allocation4], 128
    $region57: #{tpu_custom_call.1} parent=1 // pred_fallthru
      _
    %837 = vsyncpa [#allocation3], 1
    %838 = vsyncpa [#allocation6], 1
    %839 = vsyncpa [#allocation4], 1

</llo_original>
